<compile_context>
chip_gen: v7x
topology: tpu7x:2x2x1
jax: 0.10.0
libtpu: 0.0.40
codegen_flags: <defaults>
</compile_context>

<pallas_src>
import numpy as np
import jax
import jax.numpy as jnp
from jax.experimental import pallas as pl
from jax.experimental.pallas import tpu as pltpu

JOINTS = 24
DIM = 3
FLAT = JOINTS * DIM  # 72
LANE = 128


# ----------------------------------------------------------------------------
# host-side helpers (glue): base_R computation (euler2mat + matrix_to_axis_angle)
# ----------------------------------------------------------------------------
def _euler2mat_sxyz(ai, aj, ak):
    cx, sx = np.cos(ai), np.sin(ai)
    cy, sy = np.cos(aj), np.sin(aj)
    cz, sz = np.cos(ak), np.sin(ak)
    Rx = np.array([[1, 0, 0], [0, cx, -sx], [0, sx, cx]], dtype=np.float64)
    Ry = np.array([[cy, 0, sy], [0, 1, 0], [-sy, 0, cy]], dtype=np.float64)
    Rz = np.array([[cz, -sz, 0], [sz, cz, 0], [0, 0, 1]], dtype=np.float64)
    # static ('s') xyz convention: R = Rz(ak) @ Ry(aj) @ Rx(ai)
    return Rz @ Ry @ Rx


def _matrix_to_axis_angle(R):
    angle = np.arccos(np.clip((np.trace(R) - 1.0) / 2.0, -1.0, 1.0))
    axis = np.array([R[2, 1] - R[1, 2], R[0, 2] - R[2, 0], R[1, 0] - R[0, 1]])
    axis = axis / (2.0 * np.sin(angle))
    return (axis * angle).astype(np.float32)


def _round_up(x, m):
    return ((x + m - 1) // m) * m


# ----------------------------------------------------------------------------
# Pallas kernel: one grid step processes TB samples
#   params_ref : (TB, 2) f32  -- col 0 = eff_idx (DB row, or K-2 for DA samples),
#                               col 1 = theta_da (0 for DB samples)
#   db_ref     : (K, 72) f32  -- padded DB, resident in VMEM (K = 128)
#   pose_ref   : (TB, 72) f32
# ----------------------------------------------------------------------------
def _sample_pose_kernel(params_ref, db_ref, pose_ref):
    tb = pose_ref.shape[0]
    k = db_ref.shape[0]

    p = params_ref[...]                                   # (TB, 2)
    eff_idx = p[:, 0:1].astype(jnp.int32)                 # (TB, 1)
    theta_da = p[:, 1:2]                                  # (TB, 1)

    cols = jax.lax.broadcasted_iota(jnp.int32, (tb, k), 1)
    coeff = (cols == eff_idx).astype(jnp.float32)         # 1.0 at the selected DB/base row
    coeff = jnp.where(cols == (k - 1), theta_da, coeff)   # theta coefficient on da_basis row

    # single MXU matmul gathers + combines everything: (TB, K) @ (K, 72)
    pose_ref[...] = jnp.dot(coeff, db_ref[...],
                            preferred_element_type=jnp.float32)


# ----------------------------------------------------------------------------
# wrapper (jit-friendly): draws -> packed params -> pallas_call
# ----------------------------------------------------------------------------
def sample_pose_pallas(db_padded, idx, use_db, theta, tb=2048):
    """db_padded: (K, 72) f32 pre-baked database (see class __init__);
       idx: int32[N]; use_db: int/bool[N]; theta: f32[N]."""
    N = idx.shape[0]
    K, feat = db_padded.shape
    row_base = K - 2

    use = use_db != 0
    eff_idx = jnp.where(use, idx, row_base).astype(jnp.float32)   # exact for idx < 2^24
    theta_da = jnp.where(use, jnp.float32(0.0), theta.astype(jnp.float32))
    params = jnp.stack([eff_idx, theta_da], axis=1)               # (N, 2) f32

    # block size: multiple of 8, >= 4 grid steps for large N (v7x megacore),
    # big enough to amortize ~0.35 us per-step overhead.
    TB = max(8, min(tb, _round_up(pl.cdiv(N, 4), 8)))
    Np = _round_up(N, TB)
    pad = Np - N
    if pad:
        # padded samples: eff_idx=0 (valid DB row), theta_da=0 -> harmless, sliced off
        params = jnp.pad(params, ((0, pad), (0, 0)))

    # explicit scoped-VMEM budget: 2x (lane-padded out block + packed input + DB) + slack
    out_bytes = TB * LANE * 4
    in_bytes = TB * LANE * 4
    db_bytes = K * LANE * 4
    vmem_limit = int(min(100 << 20,
                         max(16 << 20, 2 * (out_bytes + in_bytes + db_bytes) + (4 << 20))))

    grid_spec = pltpu.PrefetchScalarGridSpec(
        num_scalar_prefetch=0,
        grid=(Np // TB,),
        in_specs=[
            pl.BlockSpec((TB, 2), lambda i: (i, 0)),       # packed per-sample params
            pl.BlockSpec((K, feat), lambda i: (0, 0)),     # full padded DB, VMEM-resident
        ],
        out_specs=pl.BlockSpec((TB, feat), lambda i: (i, 0)),
    )

    pose_flat = pl.pallas_call(
        _sample_pose_kernel,
        grid_spec=grid_spec,
        out_shape=jax.ShapeDtypeStruct((Np, feat), jnp.float32),
        compiler_params=pltpu.CompilerParams(
            dimension_semantics=("parallel",),
            vmem_limit_bytes=vmem_limit),
    )(params, db_padded)

    pose = pose_flat[:N].reshape(N, JOINTS, DIM)
    trans = jnp.zeros((N, DIM), jnp.float32)   # constant zeros: not worth a kernel output
    return pose, trans


# ----------------------------------------------------------------------------
# module port
# ----------------------------------------------------------------------------
class DatabasePoseProviderPallas:
    """JAX/Pallas port of DatabasePoseProvider (synthetic in-memory database)."""

    def __init__(self, num_db=64, da_pose_prob=0.1, da_range=(0.0, np.pi / 4),
                 seed=0):
        self.da_pose_prob = float(da_pose_prob)
        self.da_range = tuple(da_range)
        self.num_db = int(num_db)

        # base_R = matrix_to_axis_angle(euler2mat(pi/2, 0, pi/2, 'sxyz'))
        R = _euler2mat_sxyz(np.pi / 2.0, 0.0, np.pi / 2.0)
        self.base_R = _matrix_to_axis_angle(R)                       # (3,) f32

        # synthetic pose database; original stores fp16 and calls .float() at
        # sample time, so we store fp16-rounded f32 (exact match, no per-sample cast)
        kdb = jax.random.PRNGKey(seed)
        db = 0.3 * jax.random.normal(kdb, (num_db, JOINTS, DIM), dtype=jnp.float32)
        db_np = np.asarray(db.astype(jnp.float16).astype(jnp.float32))
        self.pose_db = jnp.asarray(db_np)                            # (num_db, 24, 3) f32

        # pre-bake structure into a padded (K, 72) database:
        #   rows [0, num_db)  : DB poses with base_R written into joint 0
        #   row  K-2          : base_full  (base_R at cols 0..2)
        #   row  K-1          : da_basis   (+1 at col 5, -1 at col 8)
        K = max(LANE, _round_up(num_db + 2, LANE))
        db_flat = db_np.reshape(num_db, FLAT).copy()
        db_flat[:, :DIM] = self.base_R
        db_padded = np.zeros((K, FLAT), dtype=np.float32)
        db_padded[:num_db] = db_flat
        db_padded[K - 2, :DIM] = self.base_R
        db_padded[K - 1, 1 * DIM + 2] = 1.0
        db_padded[K - 1, 2 * DIM + 2] = -1.0
        self.db_padded = jnp.asarray(db_padded)                      # (K, 72) f32

        # draws + packing + kernel fused in one jit (removes 3 separate RNG launches)
        self._jit_forward = jax.jit(self._forward_impl, static_argnames=("N",))

    def draw(self, N, key):
        """Random draws replacing the host-side np.random of the original."""
        k1, k2, k3 = jax.random.split(key, 3)
        seed_u = jax.random.uniform(k1, (N,), dtype=jnp.float32)
        use_db = (seed_u > self.da_pose_prob).astype(jnp.int32)
        idx = jax.random.randint(k2, (N,), 0, self.num_db, dtype=jnp.int32)
        theta = jax.random.uniform(k3, (N,), dtype=jnp.float32,
                                   minval=self.da_range[0],
                                   maxval=self.da_range[1])
        return idx, use_db, theta

    def _forward_impl(self, key, N):
        idx, use_db, theta = self.draw(N, key)
        return sample_pose_pallas(self.db_padded, idx, use_db, theta)

    def forward(self, N, key):
        # TODO(synk): original uses a host-side np.random stream; here it is jax.random keyed.
        return self._jit_forward(key, N=N)


if __name__ == "__main__":
    N = 8
    provider = DatabasePoseProviderPallas(num_db=64, da_pose_prob=0.1, seed=0)
    key = jax.random.PRNGKey(0)

    # explicit path: draw then kernel
    idx, use_db, theta = provider.draw(N, key)
    pose, trans = sample_pose_pallas(provider.db_padded, idx, use_db, theta)
    pose = jax.block_until_ready(pose)
    trans = jax.block_until_ready(trans)

    # shape / dtype checks
    assert pose.shape == (N, JOINTS, DIM) and pose.dtype == jnp.float32
    assert trans.shape == (N, DIM) and trans.dtype == jnp.float32

    # full numerical reference (numpy, same draws)
    idx_np = np.asarray(idx)
    flag_np = np.asarray(use_db)
    theta_np = np.asarray(theta)
    db_np = np.asarray(provider.pose_db)                     # (num_db, 24, 3)

    da_np = np.zeros((N, JOINTS, DIM), dtype=np.float32)
    da_np[:, 1, 2] = theta_np
    da_np[:, 2, 2] = -theta_np
    ref = np.where(flag_np[:, None, None] != 0, db_np[idx_np], da_np)
    ref[:, 0, :] = provider.base_R

    np.testing.assert_allclose(np.asarray(pose), ref, rtol=1e-5, atol=1e-6)
    np.testing.assert_allclose(np.asarray(trans), np.zeros((N, DIM)), atol=0.0)

    # jitted end-to-end forward (draw + pack + kernel fused) must match the same draws
    pose2, trans2 = provider.forward(N, key)
    pose2 = jax.block_until_ready(pose2)
    assert pose2.shape == (N, JOINTS, DIM) and trans2.shape == (N, DIM)
    np.testing.assert_allclose(np.asarray(pose2), ref, rtol=1e-5, atol=1e-6)

    print("KERNEL_OK")
</pallas_src>

<mosaic_0001>
module attributes {stable_mosaic.version = 11 : i64} {
  func.func @_sample_pose_kernel(%arg0: i32, %arg1: memref<8x2xf32, #tpu.memory_space<vmem>>, %arg2: memref<128x72xf32, #tpu.memory_space<vmem>>, %arg3: memref<8x72xf32, #tpu.memory_space<vmem>>) attributes {dimension_semantics = [#tpu.dimension_semantics<parallel>], iteration_bounds = array<i64: 1>, scalar_prefetch = 0 : i64, scratch_operands = 0 : i64, tpu.core_type = #tpu.core_type<tc>, window_params = [{transform_indices = @transform_0, window_bounds = array<i64: 8, 2>}, {pipeline_mode = #tpu.pipeline_mode<synchronous>, transform_indices = @transform_1, window_bounds = array<i64: 128, 72>}, {transform_indices = @transform_2, window_bounds = array<i64: 8, 72>}]} {
    %c0 = arith.constant 0 : index
    %c0_0 = arith.constant 0 : index
    %0 = vector.load %arg1[%c0, %c0_0] : memref<8x2xf32, #tpu.memory_space<vmem>>, vector<8x2xf32>
    %1 = vector.extract_strided_slice %0 {offsets = [0, 0], sizes = [8, 1], strides = [1, 1]} : vector<8x2xf32> to vector<8x1xf32>
    %2 = arith.fptosi %1 : vector<8x1xf32> to vector<8x1xi32>
    %3 = vector.extract_strided_slice %0 {offsets = [0, 1], sizes = [8, 1], strides = [1, 1]} : vector<8x2xf32> to vector<8x1xf32>
    %4 = tpu.iota {dimensions = array<i32: 1>} : vector<8x128xi32>
    %5 = vector.broadcast %2 : vector<8x1xi32> to vector<8x128xi32>
    %6 = arith.cmpi eq, %4, %5 : vector<8x128xi32>
    %7 = arith.extui %6 : vector<8x128xi1> to vector<8x128xi32>
    %8 = arith.sitofp %7 : vector<8x128xi32> to vector<8x128xf32>
    %c127_i32 = arith.constant 127 : i32
    %9 = vector.broadcast %c127_i32 : i32 to vector<8x128xi32>
    %10 = arith.cmpi eq, %4, %9 : vector<8x128xi32>
    %11 = vector.shape_cast %3 : vector<8x1xf32> to vector<8x1xf32>
    %12 = vector.broadcast %11 : vector<8x1xf32> to vector<8x128xf32>
    %13 = arith.select %10, %12, %8 : vector<8x128xi1>, vector<8x128xf32>
    %c0_1 = arith.constant 0 : index
    %c0_2 = arith.constant 0 : index
    %14 = vector.load %arg2[%c0_1, %c0_2] : memref<128x72xf32, #tpu.memory_space<vmem>>, vector<128x72xf32>
    %cst = arith.constant dense<0.000000e+00> : vector<8x72xf32>
    %15 = tpu.matmul %13, %14, %cst {dimension_numbers = #tpu.dot_dimension_numbers<[1], [0], [0], [1], [0, 0, 1, 1], [], []>} : vector<8x128xf32>, vector<128x72xf32>, vector<8x72xf32> -> vector<8x72xf32>
    %c0_3 = arith.constant 0 : index
    %c0_4 = arith.constant 0 : index
    %16 = vector.load %arg3[%c0_3, %c0_4] : memref<8x72xf32, #tpu.memory_space<vmem>>, vector<8x72xf32>
    tpu.vector_store %arg3[%c0_3, %c0_4], %15 {strides = array<i32>} : memref<8x72xf32, #tpu.memory_space<vmem>>, vector<8x72xf32>,
    return
  }
  func.func @transform_0(%arg0: i32) -> (i32, i32) {
    %c0_i32 = arith.constant 0 : i32
    %c0_i32_0 = arith.constant 0 : i32
    return %arg0, %c0_i32 : i32, i32
  }
  func.func @transform_1(%arg0: i32) -> (i32, i32) {
    %c0_i32 = arith.constant 0 : i32
    %c0_i32_0 = arith.constant 0 : i32
    %c0_i32_1 = arith.constant 0 : i32
    return %c0_i32, %c0_i32_0 : i32, i32
  }
  func.func @transform_2(%arg0: i32) -> (i32, i32) {
    %c0_i32 = arith.constant 0 : i32
    %c0_i32_0 = arith.constant 0 : i32
    return %arg0, %c0_i32 : i32, i32
  }
}

</mosaic_0001>

<llo_original>
// kernel: tpu_custom_call.1
$region0: #{tpu_custom_call.1}
  #allocation0 [shape = 'u32[]', space=smem, size = 0x4, offset = 0x4, fixed_abs, tag = 'smem constant byte address 0x4 - core index']
  #allocation1 [shape = 'u32[144,128]{1,0:T(1,128)}', space=vmem, size = 0x12000, scoped, tag = 'internal scratch']
  %s0 = inlined_call_operand.vmem [shape: f32[8,2], index: 0, kind: input, shape index: {}]
  %s1 = inlined_call_operand.vmem [shape: f32[128,72], index: 1, kind: input, shape index: {}]
  %s2 = inlined_call_operand.hbm [shape: f32[8,72], index: 2, kind: output, shape index: {}]
  %s3 = sld [smem:[#allocation0]]
  $region18: #{tpu_custom_call.1} parent=0
    _
  %s5 = ssub.s32 1, %s3
  %s6 = scalar_select 0, %s5, %s3
  $region1: #{tpu_custom_call.1} parent=0
    #allocation2 [shape = 'u8[4096]{0}', space=vmem, size = 0x1000, scoped, tag = 'output window, operand 0, single buffered']
    #allocation3 [shape = 's32[1]{0}', space=sflag, size = 0x4, scoped, tag = 'scoped memory for tpu_custom_call.1']
    %7 = vsyncpa [#allocation3], 0
    // Predicated region
    $region2: #{tpu_custom_call.1} parent=1 // pred_check
      _
    $region3: #{tpu_custom_call.1} parent=1 // pred_check_branch
      %9 = sbr.rel (0) target = $region5
    $region4: #{tpu_custom_call.1} parent=1 // pred_region
      _
    $region5: #{tpu_custom_call.1} parent=1 // pred_fallthru
      _
    // Predicated region
    $region6: #{tpu_custom_call.1} parent=1 // pred_check
      _
    $region7: #{tpu_custom_call.1} parent=1 // pred_check_branch
      %11 = sbr.rel (0) target = $region9
    $region8: #{tpu_custom_call.1} parent=1 // pred_region
      _
    $region9: #{tpu_custom_call.1} parent=1 // pred_fallthru
      _
    %v12 = vld [vmem:[%s0] sm:$0xff]
    %v13 = vcvt.f32.s32.to.zero.pseudo %v12
    %v14 = vlaneseq
    %v15 = vand.u32 %v14, 127
    %16 = vset.pattern.permute.xlu0 0
    %17 = vperm.xlu0 %16, %v13
    %v18 = vpop.permute.xlu0 %17
    %vm19 = vcmp.eq.s32.totalorder %v15, %v18
    %v20 = vsel %vm19, 1, 0
    %v21 = vcvt.s32.f32 %v20
    %vm22 = vcmp.eq.s32.totalorder %v15, 127
    %24 = vset.pattern.permute.xlu0 1
    %25 = vperm.xlu0 %24, %v12
    %v26 = vpop.permute.xlu0 %25
    %v28 = vsel %vm22, %v26, %v21
    %v29 = vld [vmem:[%s1] sm:$0xff]
    %v30 = vld [vmem:[%s1 + $0x8] sm:$0xff]
    %v31 = vld [vmem:[%s1 + $0x10] sm:$0xff]
    %v32 = vld [vmem:[%s1 + $0x18] sm:$0xff]
    %v33 = vld [vmem:[%s1 + $0x20] sm:$0xff]
    %v34 = vld [vmem:[%s1 + $0x28] sm:$0xff]
    %v35 = vld [vmem:[%s1 + $0x30] sm:$0xff]
    %v36 = vld [vmem:[%s1 + $0x38] sm:$0xff]
    %v37 = vld [vmem:[%s1 + $0x40] sm:$0xff]
    %v38 = vld [vmem:[%s1 + $0x48] sm:$0xff]
    %v39 = vld [vmem:[%s1 + $0x50] sm:$0xff]
    %v40 = vld [vmem:[%s1 + $0x58] sm:$0xff]
    %v41 = vld [vmem:[%s1 + $0x60] sm:$0xff]
    %v42 = vld [vmem:[%s1 + $0x68] sm:$0xff]
    %v43 = vld [vmem:[%s1 + $0x70] sm:$0xff]
    %v44 = vld [vmem:[%s1 + $0x78] sm:$0xff]
    %45 = vmatprep.subr.mxu0 0.0
    %46 = vmatpush1.msra.mxu0 %v29
    %47 = vmatprep.subr.mxu0 0.0
    %48 = vmatpush1.msra.mxu0 %v30
    %49 = vmatprep.subr.mxu0 0.0
    %50 = vmatpush1.msra.mxu0 %v31
    %51 = vmatprep.subr.mxu0 0.0
    %52 = vmatpush1.msra.mxu0 %v32
    %53 = vmatprep.subr.mxu0 0.0
    %54 = vmatpush1.msra.mxu0 %v33
    %55 = vmatprep.subr.mxu0 0.0
    %56 = vmatpush1.msra.mxu0 %v34
    %57 = vmatprep.subr.mxu0 0.0
    %58 = vmatpush1.msra.mxu0 %v35
    %59 = vmatprep.subr.mxu0 0.0
    %60 = vmatpush1.msra.mxu0 %v36
    %61 = vmatprep.subr.mxu0 0.0
    %62 = vmatpush1.msra.mxu0 %v37
    %63 = vmatprep.subr.mxu0 0.0
    %64 = vmatpush1.msra.mxu0 %v38
    %65 = vmatprep.subr.mxu0 0.0
    %66 = vmatpush1.msra.mxu0 %v39
    %67 = vmatprep.subr.mxu0 0.0
    %68 = vmatpush1.msra.mxu0 %v40
    %69 = vmatprep.subr.mxu0 0.0
    %70 = vmatpush1.msra.mxu0 %v41
    %71 = vmatprep.subr.mxu0 0.0
    %72 = vmatpush1.msra.mxu0 %v42
    %73 = vmatprep.subr.mxu0 0.0
    %74 = vmatpush1.msra.mxu0 %v43
    %75 = vmatprep.subr.mxu0 0.0
    %76 = vmatpush1.msra.mxu0 %v44
    %77 = vmatprep.subr.mxu0 0.0
    %78 = vmatpush1.msra.mxu0 0.0
    %79 = vmatprep.subr.mxu0 0.0
    %80 = vmatpush1.msra.mxu0 0.0
    %81 = vmatprep.subr.mxu0 0.0
    %82 = vmatpush1.msra.mxu0 0.0
    %83 = vmatprep.subr.mxu0 0.0
    %84 = vmatpush1.msra.mxu0 0.0
    %85 = vmatprep.subr.mxu0 0.0
    %86 = vmatpush1.msra.mxu0 0.0
    %87 = vmatprep.subr.mxu0 0.0
    %88 = vmatpush1.msra.mxu0 0.0
    %89 = vmatprep.subr.mxu0 0.0
    %90 = vmatpush1.msra.mxu0 0.0
    %91 = vmatprep.subr.mxu0 0.0
    %92 = vmatpush1.msra.mxu0 0.0
    %93 = vmatprep.subr.mxu0 0.0
    %94 = vmatpush1.msra.mxu0 0.0
    %95 = vmatprep.subr.mxu0 0.0
    %96 = vmatpush1.msra.mxu0 0.0
    %97 = vmatprep.subr.mxu0 0.0
    %98 = vmatpush1.msra.mxu0 0.0
    %99 = vmatprep.subr.mxu0 0.0
    %100 = vmatpush1.msra.mxu0 0.0
    %101 = vmatprep.subr.mxu0 0.0
    %102 = vmatpush1.msra.mxu0 0.0
    %103 = vmatprep.subr.mxu0 0.0
    %104 = vmatpush1.msra.mxu0 0.0
    %105 = vmatprep.subr.mxu0 0.0
    %106 = vmatpush1.msra.mxu0 0.0
    %107 = vmatprep.subr.mxu0 0.0
    %108 = vmatpush1.msra.mxu0 0.0
    %109 = vmatprep.mubr.f32.mxu0 0.0
    %110 = vmatmul.mubr.f32.gmra.mrb[0].mxu0 %v28
    %v111 = vpop.f32.mrb[0].mxu0
    %v112 = vadd.f32 0.0, %v111
    %v113 = vpop.f32.mrb[0].mxu0
    %114 = vdwg.mxu0
    %vm115 = vcmask 588800
    %116 = vst.msk [vmem:[#allocation2] sm:$0xff] %vm115, %v112
    // Predicated region
    $region10: #{tpu_custom_call.1} parent=1 // pred_check
      _
    $region11: #{tpu_custom_call.1} parent=1 // pred_check_branch
      %118 = sbr.rel (0) target = $region13
    $region12: #{tpu_custom_call.1} parent=1 // pred_region
      %s120 = ssub.s32 128, 128
      %121 = vsyncadd [#allocation3], %s120
      %s123 = sshll.u32 [#allocation2], 4
      %s124 = int_to_ptr.vmem [resolvable:$true] %s123
      %126 = dma.vmem_to_hbm [thread:$0]  %s124, 128, %s2, [#allocation3]
    $region13: #{tpu_custom_call.1} parent=1 // pred_fallthru
      _
    // Predicated region
    $region14: #{tpu_custom_call.1} parent=1 // pred_check
      _
    $region15: #{tpu_custom_call.1} parent=1 // pred_check_branch
      %128 = sbr.rel (0) target = $region17
    $region16: #{tpu_custom_call.1} parent=1 // pred_region
      %129 = dma.done [#allocation3], 128
    $region17: #{tpu_custom_call.1} parent=1 // pred_fallthru
      _
    %130 = vsyncpa [#allocation3], 1

</llo_original>
